<compile_context>
chip_gen: v5e
topology: v5e:2x2
jax: 0.10.0
libtpu: 0.0.40
codegen_flags: <defaults>
</compile_context>

<pallas_src>
import math

import jax
import jax.numpy as jnp
from jax import lax
from jax.experimental import pallas as pl
from jax.experimental.pallas import tpu as pltpu


def _cdiv(a, b):
    return -(-a // b)


def _round_up(x, m):
    return _cdiv(x, m) * m


def _vmem_budget_bytes() -> int:
    """Usable VMEM budget (85% of physical); conservative fallback = v7x's 64 MiB."""
    cap = 64 * 1024 * 1024
    try:
        cap = int(pltpu.get_tpu_info().vmem_capacity_bytes)
    except Exception:
        pass
    return max(16 * 1024 * 1024, int(cap * 0.85))


def _coeffs_kernel(x_ref, w_ref, o_ref):
    # x_ref: (TB, K), w_ref: (TN, K)  ->  o_ref: (TB, TN)
    # Contract on the last dim of both operands: y = x @ W^T without materializing W^T.
    o_ref[...] = lax.dot_general(
        x_ref[...],
        w_ref[...],
        dimension_numbers=(((1,), (1,)), ((), ())),
        preferred_element_type=jnp.float32,
    ).astype(o_ref.dtype)


def coeffs_network_forward(x, weight, *, tb_max=512, tn_max=512, force_pallas=False):
    """
    x:      (batch, n_combinations)
    weight: (n_features, n_combinations)   -- nn.Linear.weight convention (bias=False)
    returns (batch, n_features)            -- y = x @ weight.T
    """
    B, K = x.shape
    N, Kw = weight.shape
    assert K == Kw, "n_combinations mismatch between x and weight"

    # ---- small-problem fast path: pallas launch + pad/slice would dominate wall-clock. ----
    if not force_pallas and (B * K * N) < (1 << 20):
        y = lax.dot_general(
            x, weight,
            dimension_numbers=(((1,), (1,)), ((), ())),
            preferred_element_type=jnp.float32,
        )
        return y.astype(x.dtype)

    itemsize = jnp.dtype(x.dtype).itemsize
    cap = _vmem_budget_bytes()

    # ---- feature (N) tiling: keep the whole weight resident whenever it fits. ----
    if 2 * N * K * itemsize <= cap // 2:
        TN = N          # full-extent block: exempt from 128 rule, no N padding needed;
        N_out = N       # weight fetched from HBM exactly once and stays VMEM-resident.
    else:
        # Weight too big for one block: tile features lane-densely (pad N up to 128s).
        # TODO(synk): add a K grid axis + f32 VMEM accumulator for extreme n_combinations
        # where even a (128, K) weight tile does not fit in VMEM.
        N_out = _round_up(N, 128)
        tn_fit = max(128, (((cap // 3) // (2 * K * itemsize)) // 128) * 128)
        TN = max(128, (min(tn_max, N_out, tn_fit) // 128) * 128)
        N_out = _round_up(N_out, TN)   # TN divides N_out -> every block stays in bounds.

    # ---- batch (B) tiling: balanced, budget-driven, multiple of 8. ----
    B8 = _round_up(max(B, 1), 8)
    w_block_bytes = 2 * TN * K * itemsize               # double-buffered weight tile
    per_row_bytes = 2 * (K + TN) * itemsize             # x row + out row, double-buffered
    tb_budget = max(8, ((cap - w_block_bytes) // per_row_bytes // 8) * 8)
    tb_cap = max(8, min(_round_up(tb_max, 8), tb_budget))
    nb = _cdiv(B8, tb_cap)
    TB = _round_up(_cdiv(B8, nb), 8)
    nn = _cdiv(N_out, TN)

    # Give both v7x TensorCores work if the whole problem would be a single grid step.
    if nb == 1 and nn == 1 and B8 >= 16:
        nb = 2
        TB = _round_up(_cdiv(B8, nb), 8)
    Bp = nb * TB

    # ---- pad only what is strictly required (batch rows; N only when the weight is tiled). ----
    x_p = x if Bp == B else jnp.pad(x, ((0, Bp - B), (0, 0)))
    w_p = weight if N_out == N else jnp.pad(weight, ((0, N_out - N), (0, 0)))

    # ---- grid order: larger operand on the OUTER axis -> it is streamed exactly once. ----
    batch_outer = (Bp * K) >= (N_out * K)
    if batch_outer:
        grid = (nb, nn)
        x_map = lambda b, f: (b, 0)
        w_map = lambda b, f: (f, 0)
        o_map = lambda b, f: (b, f)
    else:
        grid = (nn, nb)
        x_map = lambda f, b: (b, 0)
        w_map = lambda f, b: (f, 0)
        o_map = lambda f, b: (b, f)

    # ---- VMEM limit: 1.5x the actual double-buffered need, capped per generation, and
    #      never clamped below what the BlockSpecs require. ----
    vmem_needed = 2 * (TB * K + TN * K + TB * TN) * itemsize
    vmem_limit = min(cap, max(4 * 1024 * 1024, int(math.ceil(1.5 * vmem_needed))))
    vmem_limit = max(vmem_limit, vmem_needed)

    cost = pl.CostEstimate(
        flops=2 * B * K * N,
        transcendentals=0,
        bytes_accessed=(B * K + N * K + B * N) * itemsize,
    )

    out = pl.pallas_call(
        _coeffs_kernel,
        out_shape=jax.ShapeDtypeStruct((Bp, N_out), x.dtype),
        grid_spec=pltpu.PrefetchScalarGridSpec(
            num_scalar_prefetch=0,
            grid=grid,
            in_specs=[
                pl.BlockSpec((TB, K), x_map),
                pl.BlockSpec((TN, K), w_map),
            ],
            out_specs=pl.BlockSpec((TB, TN), o_map),
        ),
        compiler_params=pltpu.CompilerParams(
            dimension_semantics=("parallel", "parallel"),
            vmem_limit_bytes=int(vmem_limit),
        ),
        cost_estimate=cost,
    )(x_p, w_p)

    if Bp != B or N_out != N:
        out = out[:B, :N]
    return out


if __name__ == "__main__":
    key = jax.random.PRNGKey(0)

    def ref(x, w):
        return x @ w.T

    # Case 1: tiny shape typical of CoeffsNetwork — exercise both the fast path (default)
    # and the Pallas kernel (force_pallas=True).
    batch, n_comb, n_feat = 8, 32, 16
    k1, k2, key = jax.random.split(key, 3)
    x = jax.random.normal(k1, (batch, n_comb), dtype=jnp.float32)
    bound = 1.0 / jnp.sqrt(jnp.float32(n_comb))
    w = jax.random.uniform(k2, (n_feat, n_comb), jnp.float32, -bound, bound)

    y_fast = coeffs_network_forward(x, w)                         # XLA fast path
    y_pallas = coeffs_network_forward(x, w, force_pallas=True)    # Pallas kernel
    jax.block_until_ready((y_fast, y_pallas))
    assert y_pallas.shape == (batch, n_feat)
    assert jnp.allclose(y_fast, ref(x, w), atol=1e-5, rtol=1e-5)
    assert jnp.allclose(y_pallas, ref(x, w), atol=1e-5, rtol=1e-5)

    # Case 2: awkward non-multiple shapes — exercises balanced batch padding, the resident
    # weight block, and the megacore split.
    batch, n_comb, n_feat = 300, 37, 5
    k1, k2, key = jax.random.split(key, 3)
    x = jax.random.normal(k1, (batch, n_comb), dtype=jnp.float32)
    bound = 1.0 / jnp.sqrt(jnp.float32(n_comb))
    w = jax.random.uniform(k2, (n_feat, n_comb), jnp.float32, -bound, bound)

    y = coeffs_network_forward(x, w, force_pallas=True)
    jax.block_until_ready(y)
    assert y.shape == (batch, n_feat)
    assert jnp.allclose(y, ref(x, w), atol=1e-4, rtol=1e-4)

    print("KERNEL_OK")
</pallas_src>

<mosaic_0001>
module attributes {stable_mosaic.version = 11 : i64} {
  func.func @_coeffs_kernel(%arg0: i32, %arg1: i32, %arg2: memref<8x32xf32, #tpu.memory_space<vmem>>, %arg3: memref<16x32xf32, #tpu.memory_space<vmem>>, %arg4: memref<8x16xf32, #tpu.memory_space<vmem>>) attributes {dimension_semantics = [#tpu.dimension_semantics<parallel>, #tpu.dimension_semantics<parallel>], iteration_bounds = array<i64: 1, 1>, scalar_prefetch = 0 : i64, scratch_operands = 0 : i64, tpu.core_type = #tpu.core_type<tc>, window_params = [{transform_indices = @transform_0, window_bounds = array<i64: 8, 32>}, {transform_indices = @transform_1, window_bounds = array<i64: 16, 32>}, {transform_indices = @transform_2, window_bounds = array<i64: 8, 16>}]} {
    %c0 = arith.constant 0 : index
    %c0_0 = arith.constant 0 : index
    %0 = vector.load %arg2[%c0, %c0_0] : memref<8x32xf32, #tpu.memory_space<vmem>>, vector<8x32xf32>
    %c0_1 = arith.constant 0 : index
    %c0_2 = arith.constant 0 : index
    %1 = vector.load %arg3[%c0_1, %c0_2] : memref<16x32xf32, #tpu.memory_space<vmem>>, vector<16x32xf32>
    %cst = arith.constant dense<0.000000e+00> : vector<8x16xf32>
    %2 = tpu.matmul %0, %1, %cst {dimension_numbers = #tpu.dot_dimension_numbers<[1], [1], [0], [0], [0, 0, 1, 0], [], []>} : vector<8x32xf32>, vector<16x32xf32>, vector<8x16xf32> -> vector<8x16xf32>
    %c0_3 = arith.constant 0 : index
    %c0_4 = arith.constant 0 : index
    %3 = vector.load %arg4[%c0_3, %c0_4] : memref<8x16xf32, #tpu.memory_space<vmem>>, vector<8x16xf32>
    tpu.vector_store %arg4[%c0_3, %c0_4], %2 {strides = array<i32>} : memref<8x16xf32, #tpu.memory_space<vmem>>, vector<8x16xf32>,
    return
  }
  func.func @transform_0(%arg0: i32, %arg1: i32) -> (i32, i32) {
    %c0_i32 = arith.constant 0 : i32
    %c0_i32_0 = arith.constant 0 : i32
    return %arg1, %c0_i32 : i32, i32
  }
  func.func @transform_1(%arg0: i32, %arg1: i32) -> (i32, i32) {
    %c0_i32 = arith.constant 0 : i32
    %c0_i32_0 = arith.constant 0 : i32
    return %arg0, %c0_i32 : i32, i32
  }
  func.func @transform_2(%arg0: i32, %arg1: i32) -> (i32, i32) {
    %c0_i32 = arith.constant 0 : i32
    return %arg1, %arg0 : i32, i32
  }
}

</mosaic_0001>

<llo_original>
// kernel: tpu_custom_call.1
$region0: #{tpu_custom_call.1}
  #allocation0 [shape = 'u32[]', space=smem, size = 0x4, offset = 0x4, fixed_abs, tag = 'smem constant byte address 0x4 - core index']
  #allocation1 [shape = 'u32[72,128]{1,0:T(1,128)}', space=vmem, size = 0x9000, scoped, tag = 'internal scratch']
  %s0 = inlined_call_operand.hbm [shape: f32[8,32], index: 0, kind: input, shape index: {}]
  %s1 = inlined_call_operand.hbm [shape: f32[16,32], index: 1, kind: input, shape index: {}]
  %s2 = inlined_call_operand.hbm [shape: f32[8,16], index: 2, kind: output, shape index: {}]
  %s3 = sld [smem:[#allocation0]]
  $region26: #{tpu_custom_call.1} parent=0
    _
  %s5 = ssub.s32 1, %s3
  %s6 = scalar_select 0, %s5, %s3
  $region1: #{tpu_custom_call.1} parent=0
    #allocation2 [shape = 'u8[4096]{0}', space=vmem, size = 0x1000, scoped, tag = 'input window, operand 0, single buffered']
    #allocation3 [shape = 's32[1]{0}', space=sflag, size = 0x4, scoped, tag = 'scoped memory for tpu_custom_call.1']
    #allocation4 [shape = 's32[1]{0}', space=sflag, size = 0x4, scoped, tag = 'scoped memory for tpu_custom_call.1']
    #allocation5 [shape = 'u8[8192]{0}', space=vmem, size = 0x2000, scoped, tag = 'input window, operand 1, single buffered']
    #allocation6 [shape = 's32[1]{0}', space=sflag, size = 0x4, scoped, tag = 'scoped memory for tpu_custom_call.1']
    #allocation7 [shape = 'u8[4096]{0}', space=vmem, size = 0x1000, scoped, tag = 'output window, operand 0, single buffered']
    %7 = vsyncpa [#allocation3], 0
    %8 = vsyncpa [#allocation6], 0
    %9 = vsyncpa [#allocation4], 0
    // Predicated region
    $region2: #{tpu_custom_call.1} parent=1 // pred_check
      _
    $region3: #{tpu_custom_call.1} parent=1 // pred_check_branch
      %11 = sbr.rel (0) target = $region5
    $region4: #{tpu_custom_call.1} parent=1 // pred_region
      %13 = vsyncadd [#allocation3], 0
      %s15 = sshll.u32 %s0, 4
      %s16 = int_to_ptr.hbm [resolvable:$true] %s15
      %s17 = sshll.u32 [#allocation2], 4
      %s18 = int_to_ptr.vmem [resolvable:$true] %s17
      %20 = dma.hbm_to_vmem [thread:$0]  %s16, 128, %s18, [#allocation3]
    $region5: #{tpu_custom_call.1} parent=1 // pred_fallthru
      _
    // Predicated region
    $region6: #{tpu_custom_call.1} parent=1 // pred_check
      _
    $region7: #{tpu_custom_call.1} parent=1 // pred_check_branch
      %22 = sbr.rel (0) target = $region9
    $region8: #{tpu_custom_call.1} parent=1 // pred_region
      %24 = vsyncadd [#allocation6], 0
      %s25 = sshll.u32 %s1, 4
      %s26 = int_to_ptr.hbm [resolvable:$true] %s25
      %s27 = sshll.u32 [#allocation5], 4
      %s28 = int_to_ptr.vmem [resolvable:$true] %s27
      %33 = dma.hbm_to_vmem [thread:$0]  %s26, 256, %s28, [#allocation6], 128, 128, 8
    $region9: #{tpu_custom_call.1} parent=1 // pred_fallthru
      _
    // Predicated region
    $region10: #{tpu_custom_call.1} parent=1 // pred_check
      _
    $region11: #{tpu_custom_call.1} parent=1 // pred_check_branch
      %35 = sbr.rel (0) target = $region13
    $region12: #{tpu_custom_call.1} parent=1 // pred_region
      %37 = dma.done [#allocation3], 128
    $region13: #{tpu_custom_call.1} parent=1 // pred_fallthru
      _
    // Predicated region
    $region14: #{tpu_custom_call.1} parent=1 // pred_check
      _
    $region15: #{tpu_custom_call.1} parent=1 // pred_check_branch
      %39 = sbr.rel (0) target = $region17
    $region16: #{tpu_custom_call.1} parent=1 // pred_region
      %41 = dma.done [#allocation6], 256
    $region17: #{tpu_custom_call.1} parent=1 // pred_fallthru
      _
    %v42 = vld [vmem:[#allocation2] sm:$0xff]
    %v43 = vld [vmem:[#allocation5] sm:$0xff]
    %v44 = vld [vmem:[#allocation5 + $0x8] sm:$0xff]
    %vm45 = vcmask 261120
    %v47 = vsel %vm45, %v42, 0
    %v50 = vsel %vm45, %v43, 0
    %v53 = vsel %vm45, %v44, 0
    %55 = vmatpush.xpose.msra.mxu0 0.0
    %56 = vmatpush.xpose.msra.mxu0 0.0
    %57 = vmatpush.xpose.msra.mxu0 0.0
    %58 = vmatpush.xpose.msra.mxu0 0.0
    %59 = vmatpush.xpose.msra.mxu0 0.0
    %60 = vmatpush.xpose.msra.mxu0 0.0
    %61 = vmatpush.xpose.msra.mxu0 0.0
    %62 = vmatpush.xpose.msra.mxu0 0.0
    %63 = vmatpush.xpose.msra.mxu0 0.0
    %64 = vmatpush.xpose.msra.mxu0 0.0
    %65 = vmatpush.xpose.msra.mxu0 0.0
    %66 = vmatpush.xpose.msra.mxu0 0.0
    %67 = vmatpush.xpose.msra.mxu0 0.0
    %68 = vmatpush.xpose.msra.mxu0 0.0
    %69 = vmatpush.xpose.msra.mxu0 %v53
    %70 = vmatpush.xpose.msra.mxu0 %v50
    %71 = vmatmul.f32.gmra.mxu0 %v47
    %v72 = vpop.f32.mrf.mxu0
    %v73 = vadd.f32 0.0, %v72
    %74 = vdwg.mxu0
    %vm75 = vcmask 130048
    %76 = vst.msk [vmem:[#allocation7] sm:$0xff] %vm75, %v73
    // Predicated region
    $region18: #{tpu_custom_call.1} parent=1 // pred_check
      _
    $region19: #{tpu_custom_call.1} parent=1 // pred_check_branch
      %78 = sbr.rel (0) target = $region21
    $region20: #{tpu_custom_call.1} parent=1 // pred_region
      %80 = vsyncadd [#allocation4], 0
      %s82 = sshll.u32 [#allocation7], 4
      %s83 = int_to_ptr.vmem [resolvable:$true] %s82
      %s84 = sshll.u32 %s2, 4
      %s85 = int_to_ptr.hbm [resolvable:$true] %s84
      %87 = dma.vmem_to_hbm [thread:$0]  %s83, 128, %s85, [#allocation4]
    $region21: #{tpu_custom_call.1} parent=1 // pred_fallthru
      _
    // Predicated region
    $region22: #{tpu_custom_call.1} parent=1 // pred_check
      _
    $region23: #{tpu_custom_call.1} parent=1 // pred_check_branch
      %89 = sbr.rel (0) target = $region25
    $region24: #{tpu_custom_call.1} parent=1 // pred_region
      %91 = dma.done [#allocation4], 128
    $region25: #{tpu_custom_call.1} parent=1 // pred_fallthru
      _
    %92 = vsyncpa [#allocation3], 1
    %93 = vsyncpa [#allocation6], 1
    %94 = vsyncpa [#allocation4], 1

</llo_original>
